<compile_context>
chip_gen: v6e
topology: v6e:2x2x1
jax: 0.10.0
libtpu: 0.0.40
codegen_flags: <defaults>
</compile_context>

<pallas_src>
import functools

import jax
import jax.numpy as jnp
from jax.experimental import pallas as pl
from jax.experimental.pallas import tpu as pltpu


def _deconv_in_relu_kernel(*refs, bblk, use_in, use_relu, eps, inv_count,
                           compute_dtype):
    """One batch block (bblk images) per grid step.

    use_in=True  refs: x(bblk,K,L), w(R,K), pool(C_out,R) f32, expand(R,C_out) f32,
                       gamma(C_out,1) f32, beta(C_out,1) f32, out(bblk,R,L)
    use_in=False refs: x(bblk,K,L), w(R,K), bias(R,1) f32, out(bblk,R,L)

    R = C_out*G rows ((co,kh,kw) order), L lanes (H*W), K contraction (C_in).
    inv_count = 1 / (G * L): per-channel sample count for the IN statistics.
    """
    if use_in:
        x_ref, w_ref, pool_ref, expand_ref, g_ref, b_ref, o_ref = refs
    else:
        x_ref, w_ref, bias_ref, o_ref = refs

    w = w_ref[...]                                   # (R, K), resident weight
    if use_in:
        pool = pool_ref[...]                         # (C_out, R) 0/1 group-sum
        expand = expand_ref[...]                     # (R, C_out) 0/1 broadcast
        gamma_c = g_ref[...]                         # (C_out, 1)
        beta_c = b_ref[...]                          # (C_out, 1)
    else:
        bias_rows = bias_ref[...]                    # (R, 1)

    for b in range(bblk):                            # static unroll over block
        # In-kernel cast to the MXU dtype (VPU op; avoids a wrapper HBM pass).
        x = x_ref[b].astype(compute_dtype)           # (K, L)
        # MXU: f32 accumulate, lane-dense (L >= 128) output.
        acc = jnp.dot(w, x, preferred_element_type=jnp.float32)   # (R, L) f32

        if use_in:
            # Single-pass InstanceNorm2d(affine=True). Per-channel stats via
            # tiny pool/expand matmuls on the (R,1) row sums (no in-kernel
            # reshapes of the big accumulator, no O(R^2) grouping matrix).
            s1 = jnp.sum(acc, axis=1, keepdims=True)          # (R, 1)
            s2 = jnp.sum(acc * acc, axis=1, keepdims=True)    # (R, 1)
            m1 = jnp.dot(pool, s1, preferred_element_type=jnp.float32) * inv_count
            m2 = jnp.dot(pool, s2, preferred_element_type=jnp.float32) * inv_count
            var_c = jnp.maximum(m2 - m1 * m1, 0.0)            # clamp: cancellation
            scale_c = gamma_c * jax.lax.rsqrt(var_c + eps)    # (C_out, 1)
            shift_c = beta_c - m1 * scale_c                   # (C_out, 1)
            scale = jnp.dot(expand, scale_c, preferred_element_type=jnp.float32)
            shift = jnp.dot(expand, shift_c, preferred_element_type=jnp.float32)
            y = acc * scale + shift                           # fused norm+affine
        else:
            y = acc + bias_rows                               # conv-transpose bias

        if use_relu:
            y = jnp.maximum(y, 0.0)

        o_ref[b] = y.astype(o_ref.dtype)                      # bf16 store (default)


def make_deconv2d_params(weight, bias, gamma, beta, *, stride, use_in=True,
                         use_relu=True, eps=1e-5, compute_dtype=jnp.bfloat16):
    """Build the per-model constants once (weight layout, pool/expand, affine)."""
    C_in, C_out, k, k2 = weight.shape
    assert k == k2
    if stride == k:
        G = k * k                                              # pixel-shuffle path
        w_mat = weight.transpose(1, 2, 3, 0).reshape(C_out * G, C_in)
    else:
        # general fallback: stride-1 conv of zero-dilated input w/ flipped kernel
        G = 1
        w_flip = jnp.flip(weight, axis=(-2, -1))
        w_mat = w_flip.transpose(1, 0, 2, 3).reshape(C_out, C_in * k * k)
    R = w_mat.shape[0]

    params = dict(
        w_mat=jnp.asarray(w_mat, compute_dtype),
        C_in=C_in, C_out=C_out, k=k, stride=stride, G=G, R=R,
        use_in=use_in, use_relu=use_relu, eps=float(eps),
        compute_dtype=compute_dtype,
    )
    if use_in:
        pool = jnp.repeat(jnp.eye(C_out, dtype=jnp.float32), G, axis=1)  # (C_out,R)
        params.update(
            pool=pool,
            expand=jnp.asarray(pool.T),                                  # (R,C_out)
            gamma_c=gamma.astype(jnp.float32).reshape(C_out, 1),
            beta_c=beta.astype(jnp.float32).reshape(C_out, 1),
        )
    else:
        params['bias_rows'] = jnp.repeat(bias.astype(jnp.float32), G).reshape(R, 1)
    return params


def _pick_block_batch(n, stream_bytes_per_image, vmem_budget=24 << 20):
    """Largest batch block (<= 8, divides N) whose double-buffered streamed
    footprint stays under budget while keeping grid length >= 2 (megacore)."""
    best = 1
    for b in range(1, min(n, 8) + 1):
        if n % b:
            continue
        if n >= 2 and n // b < 2:
            continue
        if 2 * b * stream_bytes_per_image > vmem_budget:
            continue
        best = b
    return best


def deconv2d_forward(params, x, *, block_batch=None, out_dtype=jnp.bfloat16):
    """x: (N, C_in, H, W) NCHW. Returns (N, C_out, OH, OW) in out_dtype."""
    N, C_in, H, W = x.shape
    assert C_in == params['C_in']
    k, s, G, R, C_out = (params['k'], params['stride'], params['G'],
                         params['R'], params['C_out'])
    OH, OW = (H - 1) * s + k, (W - 1) * s + k

    if s == k:
        # Fast path: ConvTranspose2d(stride=k, padding=0) == pixel shuffle.
        L, K = H * W, C_in
        x_mat = x.reshape(N, C_in, L)                           # no dtype pass
    else:
        # Cold-path fallback for stride != k (not used by SANet).
        # TODO(synk): assemble patches on-chip via manual DMA instead of XLA im2col.
        L, K = OH * OW, C_in * k * k
        Hd, Wd = (H - 1) * s + 1, (W - 1) * s + 1
        x_d = jnp.zeros((N, C_in, Hd, Wd), x.dtype).at[:, :, ::s, ::s].set(x)
        x_p = jnp.pad(x_d, ((0, 0), (0, 0), (k - 1, k - 1), (k - 1, k - 1)))
        cols = [x_p[:, :, kh:kh + OH, kw:kw + OW]
                for kh in range(k) for kw in range(k)]
        x_mat = jnp.stack(cols, axis=2).reshape(N, K, L)

    # Batch blocking: amortize per-grid-step overhead; cap streamed VMEM.
    stream_bytes = K * L * x.dtype.itemsize + R * L * jnp.dtype(out_dtype).itemsize
    if block_batch is None:
        block_batch = _pick_block_batch(N, stream_bytes)
    assert N % block_batch == 0
    grid = (N // block_batch,)

    use_in, use_relu = params['use_in'], params['use_relu']
    kernel = functools.partial(
        _deconv_in_relu_kernel,
        bblk=block_batch, use_in=use_in, use_relu=use_relu,
        eps=params['eps'], inv_count=1.0 / float(G * L),
        compute_dtype=params['compute_dtype'])

    in_specs = [
        pl.BlockSpec((block_batch, K, L), lambda n: (n, 0, 0)),   # streamed input
        pl.BlockSpec((R, K), lambda n: (0, 0)),                   # resident weight
    ]
    if use_in:
        operands = (x_mat, params['w_mat'], params['pool'], params['expand'],
                    params['gamma_c'], params['beta_c'])
        in_specs += [
            pl.BlockSpec((C_out, R), lambda n: (0, 0)),
            pl.BlockSpec((R, C_out), lambda n: (0, 0)),
            pl.BlockSpec((C_out, 1), lambda n: (0, 0)),
            pl.BlockSpec((C_out, 1), lambda n: (0, 0)),
        ]
    else:
        operands = (x_mat, params['w_mat'], params['bias_rows'])
        in_specs += [pl.BlockSpec((R, 1), lambda n: (0, 0))]

    out_flat = pl.pallas_call(
        kernel,
        out_shape=jax.ShapeDtypeStruct((N, R, L), out_dtype),     # bf16 writeback
        grid_spec=pltpu.PrefetchScalarGridSpec(
            num_scalar_prefetch=0,
            grid=grid,
            in_specs=in_specs,
            out_specs=pl.BlockSpec((block_batch, R, L), lambda n: (n, 0, 0)),
        ),
        compiler_params=pltpu.CompilerParams(
            dimension_semantics=("parallel",)),                    # megacore: batch
    )(*operands)

    if s == k:
        # depth-to-space: (co, kh, kw, h, w) -> (co, h*k+kh, w*k+kw).
        # Cheap bf16 permute of the already-computed output (see TODO above).
        out = (out_flat.reshape(N, C_out, k, k, H, W)
                       .transpose(0, 1, 4, 2, 5, 3)
                       .reshape(N, C_out, OH, OW))
    else:
        out = out_flat.reshape(N, C_out, OH, OW)
    return out


def _reference(x, weight, bias, gamma, beta, stride, use_in, use_relu, eps=1e-5):
    """Pure-JAX f32 reference matching PyTorch semantics (NCHW)."""
    k = weight.shape[-1]
    w_conv = jnp.flip(weight, axis=(-2, -1)).transpose(1, 0, 2, 3)  # (C_out,C_in,k,k)
    y = jax.lax.conv_general_dilated(
        x, w_conv, window_strides=(1, 1),
        padding=[(k - 1, k - 1), (k - 1, k - 1)],
        lhs_dilation=(stride, stride),
        dimension_numbers=("NCHW", "OIHW", "NCHW"))
    y = y + bias.reshape(1, -1, 1, 1)
    if use_in:
        mean = y.mean(axis=(2, 3), keepdims=True)
        var = ((y - mean) ** 2).mean(axis=(2, 3), keepdims=True)
        y = (y - mean) / jnp.sqrt(var + eps)
        y = y * gamma.reshape(1, -1, 1, 1) + beta.reshape(1, -1, 1, 1)
    if use_relu:
        y = jnp.maximum(y, 0.0)
    return y


if __name__ == "__main__":
    # DeConv2d(in_c=4, out_c=8, k_size=2, stride=2, activate=True, In=True)
    N, C_in, H, W = 2, 4, 16, 16
    C_out, k_size, stride = 8, 2, 2

    key = jax.random.PRNGKey(0)
    kx, kw, kb, kg, kbt = jax.random.split(key, 5)
    x = jax.random.normal(kx, (N, C_in, H, W), jnp.float32)
    weight = 0.1 * jax.random.normal(kw, (C_in, C_out, k_size, k_size), jnp.float32)
    bias = 0.1 * jax.random.normal(kb, (C_out,), jnp.float32)
    gamma = 1.0 + 0.1 * jax.random.normal(kg, (C_out,), jnp.float32)
    beta = 0.1 * jax.random.normal(kbt, (C_out,), jnp.float32)

    OH = OW = (H - 1) * stride + k_size
    ref_in = _reference(x, weight, bias, gamma, beta, stride, True, True)
    ref_nb = _reference(x, weight, bias, gamma, beta, stride, False, True)

    # 1) production path: bf16 MXU operands + bf16 output, IN + ReLU,
    #    auto batch block (weight-side prep cached once in params).
    p_bf16 = make_deconv2d_params(weight, bias, gamma, beta, stride=stride,
                                  use_in=True, use_relu=True)
    out = jax.block_until_ready(deconv2d_forward(p_bf16, x))
    assert out.shape == (N, C_out, OH, OW) and out.dtype == jnp.bfloat16
    err_bf16 = float(jnp.max(jnp.abs(out.astype(jnp.float32) - ref_in)))
    assert err_bf16 < 5e-2, f"bf16 path mismatch vs reference: {err_bf16}"

    # 2) explicit batch-blocked path (2 images per grid step) must match too.
    out_b2 = jax.block_until_ready(deconv2d_forward(p_bf16, x, block_batch=2))
    err_b2 = float(jnp.max(jnp.abs(out_b2.astype(jnp.float32) - ref_in)))
    assert err_b2 < 5e-2, f"batch-blocked path mismatch vs reference: {err_b2}"

    # 3) f32 MXU operands + f32 output: must match tightly.
    p_f32 = make_deconv2d_params(weight, bias, gamma, beta, stride=stride,
                                 use_in=True, use_relu=True,
                                 compute_dtype=jnp.float32)
    out_f32 = jax.block_until_ready(
        deconv2d_forward(p_f32, x, out_dtype=jnp.float32))
    err_f32 = float(jnp.max(jnp.abs(out_f32 - ref_in)))
    assert err_f32 < 1e-4, f"f32 path mismatch vs reference: {err_f32}"

    # 4) module defaults (In=False, activate=True) exercise the bias branch.
    p_nb = make_deconv2d_params(weight, bias, gamma, beta, stride=stride,
                                use_in=False, use_relu=True,
                                compute_dtype=jnp.float32)
    out_nb = jax.block_until_ready(
        deconv2d_forward(p_nb, x, out_dtype=jnp.float32))
    err_nb = float(jnp.max(jnp.abs(out_nb - ref_nb)))
    assert err_nb < 1e-4, f"no-IN path mismatch vs reference: {err_nb}"

    print("KERNEL_OK")
</pallas_src>

<mosaic_0001>
module attributes {stable_mosaic.version = 11 : i64} {
  func.func @_deconv_in_relu_kernel(%arg0: i32, %arg1: memref<1x4x256xf32, #tpu.memory_space<vmem>>, %arg2: memref<32x4xbf16, #tpu.memory_space<vmem>>, %arg3: memref<8x32xf32, #tpu.memory_space<vmem>>, %arg4: memref<32x8xf32, #tpu.memory_space<vmem>>, %arg5: memref<8x1xf32, #tpu.memory_space<vmem>>, %arg6: memref<8x1xf32, #tpu.memory_space<vmem>>, %arg7: memref<1x32x256xbf16, #tpu.memory_space<vmem>>) attributes {dimension_semantics = [#tpu.dimension_semantics<parallel>], iteration_bounds = array<i64: 2>, scalar_prefetch = 0 : i64, scratch_operands = 0 : i64, tpu.core_type = #tpu.core_type<tc>, window_params = [{transform_indices = @transform_0, window_bounds = array<i64: 1, 4, 256>}, {pipeline_mode = #tpu.pipeline_mode<synchronous>, transform_indices = @transform_1, window_bounds = array<i64: 32, 4>}, {pipeline_mode = #tpu.pipeline_mode<synchronous>, transform_indices = @transform_2, window_bounds = array<i64: 8, 32>}, {pipeline_mode = #tpu.pipeline_mode<synchronous>, transform_indices = @transform_3, window_bounds = array<i64: 32, 8>}, {pipeline_mode = #tpu.pipeline_mode<synchronous>, transform_indices = @transform_4, window_bounds = array<i64: 8, 1>}, {pipeline_mode = #tpu.pipeline_mode<synchronous>, transform_indices = @transform_5, window_bounds = array<i64: 8, 1>}, {transform_indices = @transform_6, window_bounds = array<i64: 1, 32, 256>}]} {
    %c0 = arith.constant 0 : index
    %c0_0 = arith.constant 0 : index
    %0 = vector.load %arg2[%c0, %c0_0] : memref<32x4xbf16, #tpu.memory_space<vmem>>, vector<32x4xbf16>
    %c0_1 = arith.constant 0 : index
    %c0_2 = arith.constant 0 : index
    %1 = vector.load %arg3[%c0_1, %c0_2] : memref<8x32xf32, #tpu.memory_space<vmem>>, vector<8x32xf32>
    %c0_3 = arith.constant 0 : index
    %c0_4 = arith.constant 0 : index
    %2 = vector.load %arg4[%c0_3, %c0_4] : memref<32x8xf32, #tpu.memory_space<vmem>>, vector<32x8xf32>
    %c0_5 = arith.constant 0 : index
    %c0_6 = arith.constant 0 : index
    %3 = vector.load %arg5[%c0_5, %c0_6] : memref<8x1xf32, #tpu.memory_space<vmem>>, vector<8x1xf32>
    %c0_7 = arith.constant 0 : index
    %c0_8 = arith.constant 0 : index
    %4 = vector.load %arg6[%c0_7, %c0_8] : memref<8x1xf32, #tpu.memory_space<vmem>>, vector<8x1xf32>
    %c0_9 = arith.constant 0 : index
    %c0_10 = arith.constant 0 : index
    %c0_11 = arith.constant 0 : index
    %5 = vector.load %arg1[%c0_9, %c0_10, %c0_11] : memref<1x4x256xf32, #tpu.memory_space<vmem>>, vector<1x4x256xf32>
    %6 = vector.shape_cast %5 : vector<1x4x256xf32> to vector<4x256xf32>
    %7 = arith.truncf %6 : vector<4x256xf32> to vector<4x256xbf16>
    %cst = arith.constant dense<0.000000e+00> : vector<32x256xf32>
    %8 = tpu.matmul %0, %7, %cst {dimension_numbers = #tpu.dot_dimension_numbers<[1], [0], [0], [1], [0, 0, 1, 1], [], []>} : vector<32x4xbf16>, vector<4x256xbf16>, vector<32x256xf32> -> vector<32x256xf32>
    %cst_12 = arith.constant dense<0.000000e+00> : vector<32xf32>
    %9 = vector.multi_reduction <add>, %8, %cst_12 [1] : vector<32x256xf32> to vector<32xf32>
    %10 = vector.shape_cast %9 : vector<32xf32> to vector<32x1xf32>
    %11 = arith.mulf %8, %8 : vector<32x256xf32>
    %cst_13 = arith.constant dense<0.000000e+00> : vector<32xf32>
    %12 = vector.multi_reduction <add>, %11, %cst_13 [1] : vector<32x256xf32> to vector<32xf32>
    %13 = vector.shape_cast %12 : vector<32xf32> to vector<32x1xf32>
    %cst_14 = arith.constant dense<0.000000e+00> : vector<8x1xf32>
    %14 = tpu.matmul %1, %10, %cst_14 {dimension_numbers = #tpu.dot_dimension_numbers<[1], [0], [0], [1], [0, 0, 1, 1], [], []>} : vector<8x32xf32>, vector<32x1xf32>, vector<8x1xf32> -> vector<8x1xf32>
    %cst_15 = arith.constant 9.765625E-4 : f32
    %15 = vector.broadcast %cst_15 : f32 to vector<8x1xf32>
    %16 = arith.mulf %14, %15 : vector<8x1xf32>
    %cst_16 = arith.constant dense<0.000000e+00> : vector<8x1xf32>
    %17 = tpu.matmul %1, %13, %cst_16 {dimension_numbers = #tpu.dot_dimension_numbers<[1], [0], [0], [1], [0, 0, 1, 1], [], []>} : vector<8x32xf32>, vector<32x1xf32>, vector<8x1xf32> -> vector<8x1xf32>
    %cst_17 = arith.constant 9.765625E-4 : f32
    %18 = vector.broadcast %cst_17 : f32 to vector<8x1xf32>
    %19 = arith.mulf %17, %18 : vector<8x1xf32>
    %20 = arith.mulf %16, %16 : vector<8x1xf32>
    %21 = arith.subf %19, %20 : vector<8x1xf32>
    %cst_18 = arith.constant 0.000000e+00 : f32
    %22 = vector.broadcast %cst_18 : f32 to vector<8x1xf32>
    %23 = arith.maximumf %21, %22 : vector<8x1xf32>
    %cst_19 = arith.constant 9.99999974E-6 : f32
    %24 = vector.broadcast %cst_19 : f32 to vector<8x1xf32>
    %25 = arith.addf %23, %24 : vector<8x1xf32>
    %26 = math.rsqrt %25 : vector<8x1xf32>
    %27 = arith.mulf %3, %26 : vector<8x1xf32>
    %28 = arith.mulf %16, %27 : vector<8x1xf32>
    %29 = arith.subf %4, %28 : vector<8x1xf32>
    %cst_20 = arith.constant dense<0.000000e+00> : vector<32x1xf32>
    %30 = tpu.matmul %2, %27, %cst_20 {dimension_numbers = #tpu.dot_dimension_numbers<[1], [0], [0], [1], [0, 0, 1, 1], [], []>} : vector<32x8xf32>, vector<8x1xf32>, vector<32x1xf32> -> vector<32x1xf32>
    %cst_21 = arith.constant dense<0.000000e+00> : vector<32x1xf32>
    %31 = tpu.matmul %2, %29, %cst_21 {dimension_numbers = #tpu.dot_dimension_numbers<[1], [0], [0], [1], [0, 0, 1, 1], [], []>} : vector<32x8xf32>, vector<8x1xf32>, vector<32x1xf32> -> vector<32x1xf32>
    %32 = vector.broadcast %30 : vector<32x1xf32> to vector<32x256xf32>
    %33 = arith.mulf %8, %32 : vector<32x256xf32>
    %34 = vector.broadcast %31 : vector<32x1xf32> to vector<32x256xf32>
    %35 = arith.addf %33, %34 : vector<32x256xf32>
    %cst_22 = arith.constant 0.000000e+00 : f32
    %36 = vector.broadcast %cst_22 : f32 to vector<32x256xf32>
    %37 = arith.maximumf %35, %36 : vector<32x256xf32>
    %38 = arith.truncf %37 : vector<32x256xf32> to vector<32x256xbf16>
    %c0_23 = arith.constant 0 : index
    %c0_24 = arith.constant 0 : index
    %c0_25 = arith.constant 0 : index
    %39 = vector.load %arg7[%c0_23, %c0_24, %c0_25] : memref<1x32x256xbf16, #tpu.memory_space<vmem>>, vector<1x32x256xbf16>
    %40 = vector.shape_cast %39 : vector<1x32x256xbf16> to vector<32x256xbf16>
    %41 = vector.shape_cast %38 : vector<32x256xbf16> to vector<1x32x256xbf16>
    tpu.vector_store %arg7[%c0_23, %c0_24, %c0_25], %41 {strides = array<i32>} : memref<1x32x256xbf16, #tpu.memory_space<vmem>>, vector<1x32x256xbf16>,
    return
  }
  func.func @transform_0(%arg0: i32) -> (i32, i32, i32) {
    %c0_i32 = arith.constant 0 : i32
    %c0_i32_0 = arith.constant 0 : i32
    %c0_i32_1 = arith.constant 0 : i32
    return %arg0, %c0_i32, %c0_i32_0 : i32, i32, i32
  }
  func.func @transform_1(%arg0: i32) -> (i32, i32) {
    %c0_i32 = arith.constant 0 : i32
    %c0_i32_0 = arith.constant 0 : i32
    %c0_i32_1 = arith.constant 0 : i32
    return %c0_i32, %c0_i32_0 : i32, i32
  }
  func.func @transform_2(%arg0: i32) -> (i32, i32) {
    %c0_i32 = arith.constant 0 : i32
    %c0_i32_0 = arith.constant 0 : i32
    %c0_i32_1 = arith.constant 0 : i32
    return %c0_i32, %c0_i32_0 : i32, i32
  }
  func.func @transform_3(%arg0: i32) -> (i32, i32) {
    %c0_i32 = arith.constant 0 : i32
    %c0_i32_0 = arith.constant 0 : i32
    %c0_i32_1 = arith.constant 0 : i32
    return %c0_i32, %c0_i32_0 : i32, i32
  }
  func.func @transform_4(%arg0: i32) -> (i32, i32) {
    %c0_i32 = arith.constant 0 : i32
    %c0_i32_0 = arith.constant 0 : i32
    %c0_i32_1 = arith.constant 0 : i32
    return %c0_i32, %c0_i32_0 : i32, i32
  }
  func.func @transform_5(%arg0: i32) -> (i32, i32) {
    %c0_i32 = arith.constant 0 : i32
    %c0_i32_0 = arith.constant 0 : i32
    %c0_i32_1 = arith.constant 0 : i32
    return %c0_i32, %c0_i32_0 : i32, i32
  }
  func.func @transform_6(%arg0: i32) -> (i32, i32, i32) {
    %c0_i32 = arith.constant 0 : i32
    %c0_i32_0 = arith.constant 0 : i32
    %c0_i32_1 = arith.constant 0 : i32
    return %arg0, %c0_i32, %c0_i32_0 : i32, i32, i32
  }
}

</mosaic_0001>

<llo_original>
// kernel: tpu_custom_call.1
$region0: #{tpu_custom_call.1}
  #allocation0 [shape = 'u32[]', space=smem, size = 0x4, offset = 0x4, fixed_abs, tag = 'smem constant byte address 0x4 - core index']
  #allocation1 [shape = 'u32[144,128]{1,0:T(1,128)}', space=vmem, size = 0x12000, scoped, tag = 'internal scratch']
  %s0 = inlined_call_operand.vmem [shape: f32[2,4,256], index: 0, kind: input, shape index: {}]
  %s1 = inlined_call_operand.vmem [shape: bf16[32,4], index: 1, kind: input, shape index: {}]
  %s2 = inlined_call_operand.vmem [shape: f32[8,32], index: 2, kind: input, shape index: {}]
  %s3 = inlined_call_operand.vmem [shape: f32[32,8], index: 3, kind: input, shape index: {}]
  %s4 = inlined_call_operand.vmem [shape: f32[8,1], index: 4, kind: input, shape index: {}]
  %s5 = inlined_call_operand.vmem [shape: f32[8,1], index: 5, kind: input, shape index: {}]
  %s6 = inlined_call_operand.hbm [shape: bf16[2,32,256], index: 6, kind: output, shape index: {}]
  %s7 = sld [smem:[#allocation0]]
  $region57: #{tpu_custom_call.1} parent=0
    _
  %s9 = ssub.s32 1, %s7
  %s10 = scalar_select 0, %s9, %s7
  $region1: #{tpu_custom_call.1} parent=0
    #allocation2 [shape = 'u8[32768]{0}', space=vmem, size = 0x8000, scoped, tag = 'output window, operand 0']
    #allocation3 [shape = 's32[2]{0}', space=sflag, size = 0x8, scoped, tag = 'scoped memory for tpu_custom_call.1']
    %11 = vsyncpa [#allocation3], 0
    %s12 = scalar_lea.sflag [#allocation3], 1
    %13 = vsyncpa %s12, 0
    loop: start=0, step=1, limit=4
    $region2: #{tpu_custom_call.1} parent=1 // loop_pre_header
      _
    $region3: #{tpu_custom_call.1} parent=1 // loop_header
      %s15 = sphi 0, %s19
      %p16 = scmp.ge.s32.totalorder %s15, 4
      %s25 = sphi 0, %s27
      %s28 = sphi 0, %s25
      %s29 = sphi 0, %s28
      %s45 = sphi 0, %s29
      %s49 = sphi 0, %s49
      %s51 = sphi 0, %s49
      %s52 = sphi 0, %s51
      %s66 = sphi 0, %s52
      %s70 = sphi 0, %s70
      %s72 = sphi 0, %s70
      %s73 = sphi 0, %s72
      %s87 = sphi 0, %s73
      %s91 = sphi 0, %s91
      %s93 = sphi 0, %s91
      %s94 = sphi 0, %s93
      %s108 = sphi 0, %s94
      %s112 = sphi 0, %s112
      %s114 = sphi 0, %s112
      %s115 = sphi 0, %s114
      %s129 = sphi 0, %s115
      %s133 = sphi 0, %s133
      %s135 = sphi 0, %s133
      %s136 = sphi 0, %s135
      %s150 = sphi 0, %s136
      %s156 = sphi 0, %s158
      %s159 = sphi 0, %s156
      %s160 = sphi 0, %s159
      %s176 = sphi 0, %s160
    $region4: #{tpu_custom_call.1} parent=1 // loop_header_branch
      %18 = sbr.rel (%p16) target = $region8
    $region5: #{tpu_custom_call.1} parent=1 // loop_body
      %s20 = ssub.s32 %s15, 1
      %s21 = ssub.s32 %s15, 2
      %s22 = sadd.s32 %s15, 1
      %s23 = ssub.s32 %s15, %s22
      %p24 = scmp.eq.s32.totalorder %s23, 0
      %s26 = sadd.s32 %s25, 1
      %s27 = scalar_select %p24, %s25, %s26
      %p30 = pneg %p24
      %p31 = scmp.eq.s32.totalorder %s15, 1
      %p32 = por %p30, %p31
      %p33 = scmp.ne.s32.totalorder %s25, %s28
      %p34 = scmp.eq.s32.totalorder %s15, 0
      %p35 = por %p33, %p34
      %p36 = scmp.ne.s32.totalorder %s25, %s28
      %p37 = scmp.eq.s32.totalorder %s20, 1
      %p38 = por %p36, %p37
      %p39 = scmp.ne.s32.totalorder %s28, %s29
      %p40 = scmp.eq.s32.totalorder %s20, 0
      %p41 = por %p39, %p40
      %p42 = scmp.ne.s32.totalorder %s28, %s29
      %p43 = scmp.eq.s32.totalorder %s21, 1
      %p44 = por %p42, %p43
      %p46 = scmp.ne.s32.totalorder %s29, %s45
      %p47 = scmp.eq.s32.totalorder %s21, 0
      %p48 = por %p46, %p47
      %s50 = sadd.s32 %s49, 1
      %p53 = scmp.eq.s32.totalorder %s15, 1
      %p54 = scmp.ne.s32.totalorder %s49, %s51
      %p55 = scmp.eq.s32.totalorder %s15, 0
      %p56 = por %p54, %p55
      %p57 = scmp.ne.s32.totalorder %s49, %s51
      %p58 = scmp.eq.s32.totalorder %s20, 1
      %p59 = por %p57, %p58
      %p60 = scmp.ne.s32.totalorder %s51, %s52
      %p61 = scmp.eq.s32.totalorder %s20, 0
      %p62 = por %p60, %p61
      %p63 = scmp.ne.s32.totalorder %s51, %s52
      %p64 = scmp.eq.s32.totalorder %s21, 1
      %p65 = por %p63, %p64
      %p67 = scmp.ne.s32.totalorder %s52, %s66
      %p68 = scmp.eq.s32.totalorder %s21, 0
      %p69 = por %p67, %p68
      %s71 = sadd.s32 %s70, 1
      %p74 = scmp.eq.s32.totalorder %s15, 1
      %p75 = scmp.ne.s32.totalorder %s70, %s72
      %p76 = scmp.eq.s32.totalorder %s15, 0
      %p77 = por %p75, %p76
      %p78 = scmp.ne.s32.totalorder %s70, %s72
      %p79 = scmp.eq.s32.totalorder %s20, 1
      %p80 = por %p78, %p79
      %p81 = scmp.ne.s32.totalorder %s72, %s73
      %p82 = scmp.eq.s32.totalorder %s20, 0
      %p83 = por %p81, %p82
      %p84 = scmp.ne.s32.totalorder %s72, %s73
      %p85 = scmp.eq.s32.totalorder %s21, 1
      %p86 = por %p84, %p85
      %p88 = scmp.ne.s32.totalorder %s73, %s87
      %p89 = scmp.eq.s32.totalorder %s21, 0
      %p90 = por %p88, %p89
      %s92 = sadd.s32 %s91, 1
      %p95 = scmp.eq.s32.totalorder %s15, 1
      %p96 = scmp.ne.s32.totalorder %s91, %s93
      %p97 = scmp.eq.s32.totalorder %s15, 0
      %p98 = por %p96, %p97
      %p99 = scmp.ne.s32.totalorder %s91, %s93
      %p100 = scmp.eq.s32.totalorder %s20, 1
      %p101 = por %p99, %p100
      %p102 = scmp.ne.s32.totalorder %s93, %s94
      %p103 = scmp.eq.s32.totalorder %s20, 0
      %p104 = por %p102, %p103
      %p105 = scmp.ne.s32.totalorder %s93, %s94
      %p106 = scmp.eq.s32.totalorder %s21, 1
      %p107 = por %p105, %p106
      %p109 = scmp.ne.s32.totalorder %s94, %s108
      %p110 = scmp.eq.s32.totalorder %s21, 0
      %p111 = por %p109, %p110
      %s113 = sadd.s32 %s112, 1
      %p116 = scmp.eq.s32.totalorder %s15, 1
      %p117 = scmp.ne.s32.totalorder %s112, %s114
      %p118 = scmp.eq.s32.totalorder %s15, 0
      %p119 = por %p117, %p118
      %p120 = scmp.ne.s32.totalorder %s112, %s114
      %p121 = scmp.eq.s32.totalorder %s20, 1
      %p122 = por %p120, %p121
      %p123 = scmp.ne.s32.totalorder %s114, %s115
      %p124 = scmp.eq.s32.totalorder %s20, 0
      %p125 = por %p123, %p124
      %p126 = scmp.ne.s32.totalorder %s114, %s115
      %p127 = scmp.eq.s32.totalorder %s21, 1
      %p128 = por %p126, %p127
      %p130 = scmp.ne.s32.totalorder %s115, %s129
      %p131 = scmp.eq.s32.totalorder %s21, 0
      %p132 = por %p130, %p131
      %s134 = sadd.s32 %s133, 1
      %p137 = scmp.eq.s32.totalorder %s15, 1
      %p138 = scmp.ne.s32.totalorder %s133, %s135
      %p139 = scmp.eq.s32.totalorder %s15, 0
      %p140 = por %p138, %p139
      %p141 = scmp.ne.s32.totalorder %s133, %s135
      %p142 = scmp.eq.s32.totalorder %s20, 1
      %p143 = por %p141, %p142
      %p144 = scmp.ne.s32.totalorder %s135, %s136
      %p145 = scmp.eq.s32.totalorder %s20, 0
      %p146 = por %p144, %p145
      %p147 = scmp.ne.s32.totalorder %s135, %s136
      %p148 = scmp.eq.s32.totalorder %s21, 1
      %p149 = por %p147, %p148
      %p151 = scmp.ne.s32.totalorder %s136, %s150
      %p152 = scmp.eq.s32.totalorder %s21, 0
      %p153 = por %p151, %p152
      %s154 = ssub.s32 %s15, %s22
      %p155 = scmp.eq.s32.totalorder %s154, 0
      %s157 = sadd.s32 %s156, 1
      %s158 = scalar_select %p155, %s156, %s157
      %p161 = pneg %p155
      %p162 = scmp.eq.s32.totalorder %s15, 1
      %p163 = por %p161, %p162
      %p164 = scmp.ne.s32.totalorder %s156, %s159
      %p165 = scmp.eq.s32.totalorder %s15, 0
      %p166 = por %p164, %p165
      %p167 = scmp.ne.s32.totalorder %s156, %s159
      %p168 = scmp.eq.s32.totalorder %s20, 1
      %p169 = por %p167, %p168
      %p170 = scmp.ne.s32.totalorder %s159, %s160
      %p171 = scmp.eq.s32.totalorder %s20, 0
      %p172 = por %p170, %p171
      %p173 = scmp.ne.s32.totalorder %s159, %s160
      %p174 = scmp.eq.s32.totalorder %s21, 1
      %p175 = por %p173, %p174
      %p177 = scmp.ne.s32.totalorder %s160, %s176
      %p178 = scmp.eq.s32.totalorder %s21, 0
      %p179 = por %p177, %p178
      %p180 = scmp.le.s32.totalorder 1, %s15
      %p181 = scmp.lt.s32.totalorder %s15, 3
      %p182 = pnand %p180, %p181
      %p183 = pneg %p182
      // Predicated region
      $region9: #{tpu_custom_call.1} parent=5 // pred_check
        _
      $region10: #{tpu_custom_call.1} parent=5 // pred_check_branch
        %185 = sbr.rel (%p182) target = $region12
      $region11: #{tpu_custom_call.1} parent=5 // pred_region
        %s186 = ssub.s32 %s15, 1
        // Predicated region
        $region13: #{tpu_custom_call.1} parent=11 // pred_check
          %p187 = pneg %p62
        $region14: #{tpu_custom_call.1} parent=11 // pred_check_branch
          %189 = sbr.rel (%p187) target = $region16
        $region15: #{tpu_custom_call.1} parent=11 // pred_region
          _
        $region16: #{tpu_custom_call.1} parent=11 // pred_fallthru
          _
        // Predicated region
        $region17: #{tpu_custom_call.1} parent=11 // pred_check
          %p190 = pneg %p83
        $region18: #{tpu_custom_call.1} parent=11 // pred_check_branch
          %192 = sbr.rel (%p190) target = $region20
        $region19: #{tpu_custom_call.1} parent=11 // pred_region
          _
        $region20: #{tpu_custom_call.1} parent=11 // pred_fallthru
          _
        // Predicated region
        $region21: #{tpu_custom_call.1} parent=11 // pred_check
          %p193 = pneg %p104
        $region22: #{tpu_custom_call.1} parent=11 // pred_check_branch
          %195 = sbr.rel (%p193) target = $region24
        $region23: #{tpu_custom_call.1} parent=11 // pred_region
          _
        $region24: #{tpu_custom_call.1} parent=11 // pred_fallthru
          _
        // Predicated region
        $region25: #{tpu_custom_call.1} parent=11 // pred_check
          %p196 = pneg %p125
        $region26: #{tpu_custom_call.1} parent=11 // pred_check_branch
          %198 = sbr.rel (%p196) target = $region28
        $region27: #{tpu_custom_call.1} parent=11 // pred_region
          _
        $region28: #{tpu_custom_call.1} parent=11 // pred_fallthru
          _
        // Predicated region
        $region29: #{tpu_custom_call.1} parent=11 // pred_check
          %p199 = pneg %p146
        $region30: #{tpu_custom_call.1} parent=11 // pred_check_branch
          %201 = sbr.rel (%p199) target = $region32
        $region31: #{tpu_custom_call.1} parent=11 // pred_region
          _
        $region32: #{tpu_custom_call.1} parent=11 // pred_fallthru
          _
      $region12: #{tpu_custom_call.1} parent=5 // pred_fallthru
        _
      %p202 = scmp.lt.s32.totalorder %s15, 2
      // Predicated region
      $region33: #{tpu_custom_call.1} parent=5 // pred_check
        %p203 = pneg %p202
      $region34: #{tpu_custom_call.1} parent=5 // pred_check_branch
        %205 = sbr.rel (%p203) target = $region36
      $region35: #{tpu_custom_call.1} parent=5 // pred_region
        // Predicated region
        $region37: #{tpu_custom_call.1} parent=35 // pred_check
          %p206 = pneg %p35
        $region38: #{tpu_custom_call.1} parent=35 // pred_check_branch
          %208 = sbr.rel (%p206) target = $region40
        $region39: #{tpu_custom_call.1} parent=35 // pred_region
          %p209 = scmp.lt.s32.totalorder %s15, 1
          %s210 = scalar_select %p209, %s15, 1
          %s211 = smul.addr %s210, 2
          %s212 = smul.addr %s211, 4
          %s213 = scalar_lea.vmem %s0, %s212
        $region40: #{tpu_custom_call.1} parent=35 // pred_fallthru
          _
      $region36: #{tpu_custom_call.1} parent=5 // pred_fallthru
        _
      %p214 = scmp.le.s32.totalorder 1, %s15
      %p215 = scmp.lt.s32.totalorder %s15, 3
      %p216 = pnand %p214, %p215
      %p217 = pneg %p216
      // Predicated region
      $region41: #{tpu_custom_call.1} parent=5 // pred_check
        _
      $region42: #{tpu_custom_call.1} parent=5 // pred_check_branch
        %219 = sbr.rel (%p216) target = $region44
      $region43: #{tpu_custom_call.1} parent=5 // pred_region
        %s220 = ssub.s32 %s15, 1
        %p221 = scmp.lt.s32.totalorder %s20, 1
        %s222 = scalar_select %p221, %s20, 1
        %s223 = smul.addr %s222, 2
        %s224 = smul.addr %s223, 4
        %s225 = scalar_lea.vmem %s0, %s224
        %p226 = pneg %p41
        %p227 = pneg %p38
        %p228 = pneg %p62
        %p229 = pneg %p59
        %p230 = pneg %p83
        %p231 = pneg %p80
        %p232 = pneg %p104
        %p233 = pneg %p101
        %p234 = pneg %p125
        %p235 = pneg %p122
        %p236 = pneg %p146
        %p237 = pneg %p143
        %p238 = pneg %p172
        %p239 = pneg %p169
        %s240 = sand.u32 %s159, 1
        %s241 = scalar_lea.sflag [#allocation3], %s240
        %s242 = sand.u32 %s159, 1
        %s243 = smul.addr %s242, 32
        %s244 = scalar_lea.vmem [#allocation2], %s243
        %p245 = scmp.lt.s32.totalorder %s20, 1
        %s246 = scalar_select %p245, %s20, 1
        %s247 = smul.addr %s246, 2
        %s248 = smul.addr %s247, 4
        %s249 = scalar_lea.vmem %s0, %s248
        %v251 = vld [vmem:[%s1] sm:$0xf]
        %v252 = vld [vmem:[%s1 + $0x4] sm:$0xf]
        %v253 = vld [vmem:[%s1 + $0x8] sm:$0xf]
        %v254 = vld [vmem:[%s1 + $0xc] sm:$0xf]
        %v255 = vld [vmem:[%s2] sm:$0xff]
        %v256 = vld [vmem:[%s3] sm:$0xff]
        %v257 = vld [vmem:[%s3 + $0x8] sm:$0xff]
        %v258 = vld [vmem:[%s3 + $0x10] sm:$0xff]
        %v259 = vld [vmem:[%s3 + $0x18] sm:$0xff]
        %v260 = vld [vmem:[%s4] sm:$0xff]
        %v261 = vld [vmem:[%s5] sm:$0xff]
        %v262 = vld [vmem:[%s249] sm:$0xff]
        %v264 = vcombine.high %v262, %v262
        %v266 = vpack.c.bf16 %v262, %v262
        %v267 = vpack.c.bf16 %v264, %v264
        %v272 = vunpack.c.l.b16 %v251
        %v273 = vunpack.c.l.b16 %v252
        %v274 = vunpack.c.l.b16 %v253
        %v275 = vunpack.c.l.b16 %v254
        %v276 = vpack.c.b16 %v273, %v272
        %v277 = vpack.c.b16 %v275, %v274
        %vm278 = vcmask 31744
        %v280 = vsel %vm278, %v276, 0
        %v283 = vsel %vm278, %v277, 0
        %vm285 = vcmask 1041408
        %v287 = vsel %vm285, %v266, 0
        %v290 = vsel %vm285, %v267, 0
        %292 = vmatprep.subr.bf16.mxu0 0
        %293 = vmatpush1.bf16.msra.mxu0 0
        %294 = vmatprep.subr.bf16.mxu0 0
        %295 = vmatpush1.bf16.msra.mxu0 0
        %296 = vmatprep.subr.bf16.mxu0 0
        %297 = vmatpush1.bf16.msra.mxu0 0
        %298 = vmatprep.subr.bf16.mxu0 0
        %299 = vmatpush1.bf16.msra.mxu0 0
        %300 = vmatprep.subr.bf16.mxu0 0
        %301 = vmatpush1.bf16.msra.mxu0 0
        %302 = vmatprep.subr.bf16.mxu0 0
        %303 = vmatpush1.bf16.msra.mxu0 0
        %304 = vmatprep.subr.bf16.mxu0 0
        %305 = vmatpush1.bf16.msra.mxu0 0
        %306 = vmatprep.subr.bf16.mxu0 %v290
        %307 = vmatpush1.bf16.msra.mxu0 %v287
        %308 = vmatprep.subr.bf16.mxu0 0
        %309 = vmatpush2.bf16.msra.mxu0 0
        %310 = vmatprep.subr.bf16.mxu0 0
        %311 = vmatpush2.bf16.msra.mxu0 0
        %312 = vmatprep.subr.bf16.mxu0 0
        %313 = vmatpush2.bf16.msra.mxu0 0
        %314 = vmatprep.subr.bf16.mxu0 0
        %315 = vmatpush2.bf16.msra.mxu0 0
        %316 = vmatprep.subr.bf16.mxu0 0
        %317 = vmatpush2.bf16.msra.mxu0 0
        %318 = vmatprep.subr.bf16.mxu0 0
        %319 = vmatpush2.bf16.msra.mxu0 0
        %320 = vmatprep.subr.bf16.mxu0 0
        %321 = vmatpush2.bf16.msra.mxu0 0
        %322 = vmatprep.subr.bf16.mxu0 0
        %323 = vmatpush2.bf16.msra.mxu0 0
        %324 = vmatprep.mubr.bf16.mxu0 0
        %325 = vmatmul.mubr.bf16.gmra.mxu0 %v280
        %v326 = vpop.f32.mrf.mxu0
        %v327 = vadd.f32 0.0, %v326
        %v328 = vpop.f32.mrf.mxu0
        %v329 = vadd.f32 0.0, %v328
        %v330 = vpop.f32.mrf.mxu0
        %v331 = vadd.f32 0.0, %v330
        %v332 = vpop.f32.mrf.mxu0
        %v333 = vadd.f32 0.0, %v332
        %334 = vmatprep.mubr.bf16.mxu0 0
        %335 = vmatmul.mubr.bf16.gmra.mxu0 %v283
        %v336 = vpop.f32.mrf.mxu0
        %v337 = vadd.f32 0.0, %v336
        %v338 = vpop.f32.mrf.mxu0
        %v339 = vadd.f32 0.0, %v338
        %v340 = vpop.f32.mrf.mxu0
        %v341 = vadd.f32 0.0, %v340
        %v342 = vpop.f32.mrf.mxu0
        %v343 = vadd.f32 0.0, %v342
        %344 = vdwg.mxu0
        %v345 = vadd.f32 %v327, %v329
        %346 = vadd.xlane.f32.xlu0 %v345
        %v347 = vpop.xlane.xlu0 %346
        %v348 = vadd.f32 %v331, %v333
        %349 = vadd.xlane.f32.xlu0 %v348
        %v350 = vpop.xlane.xlu0 %349
        %v351 = vadd.f32 %v337, %v339
        %352 = vadd.xlane.f32.xlu0 %v351
        %v353 = vpop.xlane.xlu0 %352
        %v354 = vadd.f32 %v341, %v343
        %355 = vadd.xlane.f32.xlu0 %v354
        %v356 = vpop.xlane.xlu0 %355
        %v357 = vmul.f32 %v327, %v327
        %v358 = vmul.f32 %v329, %v329
        %v359 = vmul.f32 %v331, %v331
        %v360 = vmul.f32 %v333, %v333
        %v361 = vmul.f32 %v337, %v337
        %v362 = vmul.f32 %v339, %v339
        %v363 = vmul.f32 %v341, %v341
        %v364 = vmul.f32 %v343, %v343
        %v365 = vadd.f32 %v357, %v358
        %366 = vadd.xlane.f32.xlu0 %v365
        %v367 = vpop.xlane.xlu0 %366
        %v368 = vadd.f32 %v359, %v360
        %369 = vadd.xlane.f32.xlu0 %v368
        %v370 = vpop.xlane.xlu0 %369
        %v371 = vadd.f32 %v361, %v362
        %372 = vadd.xlane.f32.xlu0 %v371
        %v373 = vpop.xlane.xlu0 %372
        %v374 = vadd.f32 %v363, %v364
        %375 = vadd.xlane.f32.xlu0 %v374
        %v376 = vpop.xlane.xlu0 %375
        %vm377 = vcmask 261120
        %v379 = vsel %vm377, %v255, 0
        %381 = vmatprep.subr.mxu0 0.0
        %382 = vmatpush1.msra.mxu0 0.0
        %383 = vmatprep.subr.mxu0 0.0
        %384 = vmatpush1.msra.mxu0 0.0
        %385 = vmatprep.subr.mxu0 0.0
        %386 = vmatpush1.msra.mxu0 0.0
        %387 = vmatprep.subr.mxu0 0.0
        %388 = vmatpush1.msra.mxu0 0.0
        %389 = vmatprep.subr.mxu0 0.0
        %390 = vmatpush1.msra.mxu0 0.0
        %391 = vmatprep.subr.mxu0 0.0
        %392 = vmatpush1.msra.mxu0 0.0
        %393 = vmatprep.subr.mxu0 0.0
        %394 = vmatpush1.msra.mxu0 0.0
        %395 = vmatprep.subr.mxu0 0.0
        %396 = vmatpush1.msra.mxu0 0.0
        %397 = vmatprep.subr.mxu0 0.0
        %398 = vmatpush1.msra.mxu0 0.0
        %399 = vmatprep.subr.mxu0 0.0
        %400 = vmatpush1.msra.mxu0 0.0
        %401 = vmatprep.subr.mxu0 0.0
        %402 = vmatpush1.msra.mxu0 0.0
        %403 = vmatprep.subr.mxu0 0.0
        %404 = vmatpush1.msra.mxu0 0.0
        %405 = vmatprep.subr.mxu0 0.0
        %406 = vmatpush1.msra.mxu0 %v356
        %407 = vmatprep.subr.mxu0 0.0
        %408 = vmatpush1.msra.mxu0 %v353
        %409 = vmatprep.subr.mxu0 0.0
        %410 = vmatpush1.msra.mxu0 %v350
        %411 = vmatprep.subr.mxu0 0.0
        %412 = vmatpush1.msra.mxu0 %v347
        %413 = vmatprep.subr.mxu0 0.0
        %414 = vmatpush2.msra.mxu0 0.0
        %415 = vmatprep.subr.mxu0 0.0
        %416 = vmatpush2.msra.mxu0 0.0
        %417 = vmatprep.subr.mxu0 0.0
        %418 = vmatpush2.msra.mxu0 0.0
        %419 = vmatprep.subr.mxu0 0.0
        %420 = vmatpush2.msra.mxu0 0.0
        %421 = vmatprep.subr.mxu0 0.0
        %422 = vmatpush2.msra.mxu0 0.0
        %423 = vmatprep.subr.mxu0 0.0
        %424 = vmatpush2.msra.mxu0 0.0
        %425 = vmatprep.subr.mxu0 0.0
        %426 = vmatpush2.msra.mxu0 0.0
        %427 = vmatprep.subr.mxu0 0.0
        %428 = vmatpush2.msra.mxu0 0.0
        %429 = vmatprep.subr.mxu0 0.0
        %430 = vmatpush2.msra.mxu0 0.0
        %431 = vmatprep.subr.mxu0 0.0
        %432 = vmatpush2.msra.mxu0 0.0
        %433 = vmatprep.subr.mxu0 0.0
        %434 = vmatpush2.msra.mxu0 0.0
        %435 = vmatprep.subr.mxu0 0.0
        %436 = vmatpush2.msra.mxu0 0.0
        %437 = vmatprep.subr.mxu0 0.0
        %438 = vmatpush2.msra.mxu0 0.0
        %439 = vmatprep.subr.mxu0 0.0
        %440 = vmatpush2.msra.mxu0 0.0
        %441 = vmatprep.subr.mxu0 0.0
        %442 = vmatpush2.msra.mxu0 0.0
        %443 = vmatprep.subr.mxu0 0.0
        %444 = vmatpush2.msra.mxu0 0.0
        %445 = vmatprep.mubr.f32.mxu0 0.0
        %446 = vmatmul.mubr.f32.gmra.mxu0 %v379
        %v447 = vpop.f32.mrf.mxu0
        %v448 = vadd.f32 0.0, %v447
        %v449 = vpop.f32.mrf.mxu0
        %450 = vdwg.mxu0
        %v451 = vmul.f32 %v448, 0.0009765625
        %452 = vmatprep.subr.mxu0 0.0
        %453 = vmatpush1.msra.mxu0 0.0
        %454 = vmatprep.subr.mxu0 0.0
        %455 = vmatpush1.msra.mxu0 0.0
        %456 = vmatprep.subr.mxu0 0.0
        %457 = vmatpush1.msra.mxu0 0.0
        %458 = vmatprep.subr.mxu0 0.0
        %459 = vmatpush1.msra.mxu0 0.0
        %460 = vmatprep.subr.mxu0 0.0
        %461 = vmatpush1.msra.mxu0 0.0
        %462 = vmatprep.subr.mxu0 0.0
        %463 = vmatpush1.msra.mxu0 0.0
        %464 = vmatprep.subr.mxu0 0.0
        %465 = vmatpush1.msra.mxu0 0.0
        %466 = vmatprep.subr.mxu0 0.0
        %467 = vmatpush1.msra.mxu0 0.0
        %468 = vmatprep.subr.mxu0 0.0
        %469 = vmatpush1.msra.mxu0 0.0
        %470 = vmatprep.subr.mxu0 0.0
        %471 = vmatpush1.msra.mxu0 0.0
        %472 = vmatprep.subr.mxu0 0.0
        %473 = vmatpush1.msra.mxu0 0.0
        %474 = vmatprep.subr.mxu0 0.0
        %475 = vmatpush1.msra.mxu0 0.0
        %476 = vmatprep.subr.mxu0 0.0
        %477 = vmatpush1.msra.mxu0 %v376
        %478 = vmatprep.subr.mxu0 0.0
        %479 = vmatpush1.msra.mxu0 %v373
        %480 = vmatprep.subr.mxu0 0.0
        %481 = vmatpush1.msra.mxu0 %v370
        %482 = vmatprep.subr.mxu0 0.0
        %483 = vmatpush1.msra.mxu0 %v367
        %484 = vmatprep.subr.mxu0 0.0
        %485 = vmatpush2.msra.mxu0 0.0
        %486 = vmatprep.subr.mxu0 0.0
        %487 = vmatpush2.msra.mxu0 0.0
        %488 = vmatprep.subr.mxu0 0.0
        %489 = vmatpush2.msra.mxu0 0.0
        %490 = vmatprep.subr.mxu0 0.0
        %491 = vmatpush2.msra.mxu0 0.0
        %492 = vmatprep.subr.mxu0 0.0
        %493 = vmatpush2.msra.mxu0 0.0
        %494 = vmatprep.subr.mxu0 0.0
        %495 = vmatpush2.msra.mxu0 0.0
        %496 = vmatprep.subr.mxu0 0.0
        %497 = vmatpush2.msra.mxu0 0.0
        %498 = vmatprep.subr.mxu0 0.0
        %499 = vmatpush2.msra.mxu0 0.0
        %500 = vmatprep.subr.mxu0 0.0
        %501 = vmatpush2.msra.mxu0 0.0
        %502 = vmatprep.subr.mxu0 0.0
        %503 = vmatpush2.msra.mxu0 0.0
        %504 = vmatprep.subr.mxu0 0.0
        %505 = vmatpush2.msra.mxu0 0.0
        %506 = vmatprep.subr.mxu0 0.0
        %507 = vmatpush2.msra.mxu0 0.0
        %508 = vmatprep.subr.mxu0 0.0
        %509 = vmatpush2.msra.mxu0 0.0
        %510 = vmatprep.subr.mxu0 0.0
        %511 = vmatpush2.msra.mxu0 0.0
        %512 = vmatprep.subr.mxu0 0.0
        %513 = vmatpush2.msra.mxu0 0.0
        %514 = vmatprep.subr.mxu0 0.0
        %515 = vmatpush2.msra.mxu0 0.0
        %516 = vmatprep.mubr.f32.mxu0 0.0
        %517 = vmatmul.mubr.f32.gmra.mxu0 %v379
        %v518 = vpop.f32.mrf.mxu0
        %v519 = vadd.f32 0.0, %v518
        %v520 = vpop.f32.mrf.mxu0
        %521 = vdwg.mxu0
        %v522 = vmul.f32 %v519, 0.0009765625
        %v523 = vmul.f32 %v451, %v451
        %v524 = vsub.f32 %v522, %v523
        %v525 = vmax.f32 %v524, 0.0
        %v526 = vadd.f32 %v525, 1e-05
        %v527 = vrsqrt.pop %v526
        %v528 = vmul.f32 %v260, %v527
        %v529 = vmul.f32 %v451, %v528
        %v530 = vsub.f32 %v261, %v529
        %vm531 = vcmask 64512
        %v533 = vsel %vm531, %v256, 0
        %v536 = vsel %vm531, %v257, 0
        %v539 = vsel %vm531, %v258, 0
        %v542 = vsel %vm531, %v259, 0
        %544 = vmatprep.subr.mxu0 0.0
        %545 = vmatpush1.msra.mxu0 0.0
        %546 = vmatprep.subr.mxu0 0.0
        %547 = vmatpush1.msra.mxu0 0.0
        %548 = vmatprep.subr.mxu0 0.0
        %549 = vmatpush1.msra.mxu0 0.0
        %550 = vmatprep.subr.mxu0 0.0
        %551 = vmatpush1.msra.mxu0 0.0
        %552 = vmatprep.subr.mxu0 0.0
        %553 = vmatpush1.msra.mxu0 0.0
        %554 = vmatprep.subr.mxu0 0.0
        %555 = vmatpush1.msra.mxu0 0.0
        %556 = vmatprep.subr.mxu0 0.0
        %557 = vmatpush1.msra.mxu0 0.0
        %558 = vmatprep.subr.mxu0 0.0
        %559 = vmatpush1.msra.mxu0 0.0
        %560 = vmatprep.subr.mxu0 0.0
        %561 = vmatpush1.msra.mxu0 0.0
        %562 = vmatprep.subr.mxu0 0.0
        %563 = vmatpush1.msra.mxu0 0.0
        %564 = vmatprep.subr.mxu0 0.0
        %565 = vmatpush1.msra.mxu0 0.0
        %566 = vmatprep.subr.mxu0 0.0
        %567 = vmatpush1.msra.mxu0 0.0
        %568 = vmatprep.subr.mxu0 0.0
        %569 = vmatpush1.msra.mxu0 0.0
        %570 = vmatprep.subr.mxu0 0.0
        %571 = vmatpush1.msra.mxu0 0.0
        %572 = vmatprep.subr.mxu0 0.0
        %573 = vmatpush1.msra.mxu0 0.0
        %574 = vmatprep.subr.mxu0 0.0
        %575 = vmatpush1.msra.mxu0 %v528
        %576 = vmatprep.subr.mxu0 0.0
        %577 = vmatpush2.msra.mxu0 0.0
        %578 = vmatprep.subr.mxu0 0.0
        %579 = vmatpush2.msra.mxu0 0.0
        %580 = vmatprep.subr.mxu0 0.0
        %581 = vmatpush2.msra.mxu0 0.0
        %582 = vmatprep.subr.mxu0 0.0
        %583 = vmatpush2.msra.mxu0 0.0
        %584 = vmatprep.subr.mxu0 0.0
        %585 = vmatpush2.msra.mxu0 0.0
        %586 = vmatprep.subr.mxu0 0.0
        %587 = vmatpush2.msra.mxu0 0.0
        %588 = vmatprep.subr.mxu0 0.0
        %589 = vmatpush2.msra.mxu0 0.0
        %590 = vmatprep.subr.mxu0 0.0
        %591 = vmatpush2.msra.mxu0 0.0
        %592 = vmatprep.subr.mxu0 0.0
        %593 = vmatpush2.msra.mxu0 0.0
        %594 = vmatprep.subr.mxu0 0.0
        %595 = vmatpush2.msra.mxu0 0.0
        %596 = vmatprep.subr.mxu0 0.0
        %597 = vmatpush2.msra.mxu0 0.0
        %598 = vmatprep.subr.mxu0 0.0
        %599 = vmatpush2.msra.mxu0 0.0
        %600 = vmatprep.subr.mxu0 0.0
        %601 = vmatpush2.msra.mxu0 0.0
        %602 = vmatprep.subr.mxu0 0.0
        %603 = vmatpush2.msra.mxu0 0.0
        %604 = vmatprep.subr.mxu0 0.0
        %605 = vmatpush2.msra.mxu0 0.0
        %606 = vmatprep.subr.mxu0 0.0
        %607 = vmatpush2.msra.mxu0 0.0
        %608 = vmatprep.mubr.f32.mxu0 0.0
        %609 = vmatmul.mubr.f32.gmra.mxu0 %v533
        %v610 = vpop.f32.mrf.mxu0
        %v611 = vadd.f32 0.0, %v610
        %v612 = vpop.f32.mrf.mxu0
        %613 = vmatprep.mubr.f32.mxu0 0.0
        %614 = vmatmul.mubr.f32.gmra.mxu0 %v536
        %v615 = vpop.f32.mrf.mxu0
        %v616 = vadd.f32 0.0, %v615
        %v617 = vpop.f32.mrf.mxu0
        %618 = vmatprep.mubr.f32.mxu0 0.0
        %619 = vmatmul.mubr.f32.gmra.mxu0 %v539
        %v620 = vpop.f32.mrf.mxu0
        %v621 = vadd.f32 0.0, %v620
        %v622 = vpop.f32.mrf.mxu0
        %623 = vmatprep.mubr.f32.mxu0 0.0
        %624 = vmatmul.mubr.f32.gmra.mxu0 %v542
        %v625 = vpop.f32.mrf.mxu0
        %v626 = vadd.f32 0.0, %v625
        %v627 = vpop.f32.mrf.mxu0
        %628 = vdwg.mxu0
        %629 = vmatprep.subr.mxu0 0.0
        %630 = vmatpush1.msra.mxu0 0.0
        %631 = vmatprep.subr.mxu0 0.0
        %632 = vmatpush1.msra.mxu0 0.0
        %633 = vmatprep.subr.mxu0 0.0
        %634 = vmatpush1.msra.mxu0 0.0
        %635 = vmatprep.subr.mxu0 0.0
        %636 = vmatpush1.msra.mxu0 0.0
        %637 = vmatprep.subr.mxu0 0.0
        %638 = vmatpush1.msra.mxu0 0.0
        %639 = vmatprep.subr.mxu0 0.0
        %640 = vmatpush1.msra.mxu0 0.0
        %641 = vmatprep.subr.mxu0 0.0
        %642 = vmatpush1.msra.mxu0 0.0
        %643 = vmatprep.subr.mxu0 0.0
        %644 = vmatpush1.msra.mxu0 0.0
        %645 = vmatprep.subr.mxu0 0.0
        %646 = vmatpush1.msra.mxu0 0.0
        %647 = vmatprep.subr.mxu0 0.0
        %648 = vmatpush1.msra.mxu0 0.0
        %649 = vmatprep.subr.mxu0 0.0
        %650 = vmatpush1.msra.mxu0 0.0
        %651 = vmatprep.subr.mxu0 0.0
        %652 = vmatpush1.msra.mxu0 0.0
        %653 = vmatprep.subr.mxu0 0.0
        %654 = vmatpush1.msra.mxu0 0.0
        %655 = vmatprep.subr.mxu0 0.0
        %656 = vmatpush1.msra.mxu0 0.0
        %657 = vmatprep.subr.mxu0 0.0
        %658 = vmatpush1.msra.mxu0 0.0
        %659 = vmatprep.subr.mxu0 0.0
        %660 = vmatpush1.msra.mxu0 %v530
        %661 = vmatprep.subr.mxu0 0.0
        %662 = vmatpush2.msra.mxu0 0.0
        %663 = vmatprep.subr.mxu0 0.0
        %664 = vmatpush2.msra.mxu0 0.0
        %665 = vmatprep.subr.mxu0 0.0
        %666 = vmatpush2.msra.mxu0 0.0
        %667 = vmatprep.subr.mxu0 0.0
        %668 = vmatpush2.msra.mxu0 0.0
        %669 = vmatprep.subr.mxu0 0.0
        %670 = vmatpush2.msra.mxu0 0.0
        %671 = vmatprep.subr.mxu0 0.0
        %672 = vmatpush2.msra.mxu0 0.0
        %673 = vmatprep.subr.mxu0 0.0
        %674 = vmatpush2.msra.mxu0 0.0
        %675 = vmatprep.subr.mxu0 0.0
        %676 = vmatpush2.msra.mxu0 0.0
        %677 = vmatprep.subr.mxu0 0.0
        %678 = vmatpush2.msra.mxu0 0.0
        %679 = vmatprep.subr.mxu0 0.0
        %680 = vmatpush2.msra.mxu0 0.0
        %681 = vmatprep.subr.mxu0 0.0
        %682 = vmatpush2.msra.mxu0 0.0
        %683 = vmatprep.subr.mxu0 0.0
        %684 = vmatpush2.msra.mxu0 0.0
        %685 = vmatprep.subr.mxu0 0.0
        %686 = vmatpush2.msra.mxu0 0.0
        %687 = vmatprep.subr.mxu0 0.0
        %688 = vmatpush2.msra.mxu0 0.0
        %689 = vmatprep.subr.mxu0 0.0
        %690 = vmatpush2.msra.mxu0 0.0
        %691 = vmatprep.subr.mxu0 0.0
        %692 = vmatpush2.msra.mxu0 0.0
        %693 = vmatprep.mubr.f32.mxu0 0.0
        %694 = vmatmul.mubr.f32.gmra.mxu0 %v533
        %v695 = vpop.f32.mrf.mxu0
        %v696 = vadd.f32 0.0, %v695
        %v697 = vpop.f32.mrf.mxu0
        %698 = vmatprep.mubr.f32.mxu0 0.0
        %699 = vmatmul.mubr.f32.gmra.mxu0 %v536
        %v700 = vpop.f32.mrf.mxu0
        %v701 = vadd.f32 0.0, %v700
        %v702 = vpop.f32.mrf.mxu0
        %703 = vmatprep.mubr.f32.mxu0 0.0
        %704 = vmatmul.mubr.f32.gmra.mxu0 %v539
        %v705 = vpop.f32.mrf.mxu0
        %v706 = vadd.f32 0.0, %v705
        %v707 = vpop.f32.mrf.mxu0
        %708 = vmatprep.mubr.f32.mxu0 0.0
        %709 = vmatmul.mubr.f32.gmra.mxu0 %v542
        %v710 = vpop.f32.mrf.mxu0
        %v711 = vadd.f32 0.0, %v710
        %v712 = vpop.f32.mrf.mxu0
        %713 = vdwg.mxu0
        %715 = vset.pattern.permute.xlu0 0
        %716 = vperm.xlu0 %715, %v611
        %v717 = vpop.permute.xlu0 %716
        %720 = vset.pattern.permute.xlu0 0
        %721 = vperm.xlu0 %720, %v616
        %v722 = vpop.permute.xlu0 %721
        %725 = vset.pattern.permute.xlu0 0
        %726 = vperm.xlu0 %725, %v621
        %v727 = vpop.permute.xlu0 %726
        %730 = vset.pattern.permute.xlu0 0
        %731 = vperm.xlu0 %730, %v626
        %v732 = vpop.permute.xlu0 %731
        %v734 = vmul.f32 %v327, %v717
        %v735 = vmul.f32 %v329, %v717
        %v736 = vmul.f32 %v331, %v722
        %v737 = vmul.f32 %v333, %v722
        %v738 = vmul.f32 %v337, %v727
        %v739 = vmul.f32 %v339, %v727
        %v740 = vmul.f32 %v341, %v732
        %v741 = vmul.f32 %v343, %v732
        %743 = vset.pattern.permute.xlu0 0
        %744 = vperm.xlu0 %743, %v696
        %v745 = vpop.permute.xlu0 %744
        %748 = vset.pattern.permute.xlu0 0
        %749 = vperm.xlu0 %748, %v701
        %v750 = vpop.permute.xlu0 %749
        %753 = vset.pattern.permute.xlu0 0
        %754 = vperm.xlu0 %753, %v706
        %v755 = vpop.permute.xlu0 %754
        %758 = vset.pattern.permute.xlu0 0
        %759 = vperm.xlu0 %758, %v711
        %v760 = vpop.permute.xlu0 %759
        %v762 = vadd.f32 %v734, %v745
        %v763 = vadd.f32 %v735, %v745
        %v764 = vadd.f32 %v736, %v750
        %v765 = vadd.f32 %v737, %v750
        %v766 = vadd.f32 %v738, %v755
        %v767 = vadd.f32 %v739, %v755
        %v768 = vadd.f32 %v740, %v760
        %v769 = vadd.f32 %v741, %v760
        %v770 = vmax.f32 %v762, 0.0
        %v771 = vmax.f32 %v763, 0.0
        %v772 = vmax.f32 %v764, 0.0
        %v773 = vmax.f32 %v765, 0.0
        %v774 = vmax.f32 %v766, 0.0
        %v775 = vmax.f32 %v767, 0.0
        %v776 = vmax.f32 %v768, 0.0
        %v777 = vmax.f32 %v769, 0.0
        %v778 = vpack.c.bf16 %v772, %v770
        %v779 = vpack.c.bf16 %v773, %v771
        %v780 = vpack.c.bf16 %v776, %v774
        %v781 = vpack.c.bf16 %v777, %v775
        %v786 = vunpack.c.l.b16 %v778
        %v787 = vunpack.c.l.b16 %v779
        %v788 = vunpack.c.h.b16 %v778
        %v789 = vunpack.c.h.b16 %v779
        %v790 = vunpack.c.l.b16 %v780
        %v791 = vunpack.c.l.b16 %v781
        %v792 = vunpack.c.h.b16 %v780
        %v793 = vunpack.c.h.b16 %v781
        %v794 = vpack.c.b16 %v787, %v786
        %v795 = vpack.c.b16 %v789, %v788
        %v796 = vpack.c.b16 %v791, %v790
        %v797 = vpack.c.b16 %v793, %v792
        %802 = vst [vmem:[%s244] sm:$0xff] %v794
        %803 = vst [vmem:[%s244 + $0x8] sm:$0xff] %v795
        %804 = vst [vmem:[%s244 + $0x10] sm:$0xff] %v796
        %805 = vst [vmem:[%s244 + $0x18] sm:$0xff] %v797
        %s806 = sand.u32 %s159, 1
        %s807 = scalar_lea.sflag [#allocation3], %s806
        %s808 = sand.u32 %s159, 1
        %s809 = smul.addr %s808, 32
        %s810 = scalar_lea.vmem [#allocation2], %s809
        // Predicated region
        $region45: #{tpu_custom_call.1} parent=43 // pred_check
          %p811 = pneg %p169
        $region46: #{tpu_custom_call.1} parent=43 // pred_check_branch
          %813 = sbr.rel (%p811) target = $region48
        $region47: #{tpu_custom_call.1} parent=43 // pred_region
          %s815 = ssub.s32 512, 512
          %816 = vsyncadd %s807, %s815
          %s817 = smul.addr %s20, 8
          %s818 = smul.addr %s817, 64
          %s819 = scalar_lea.hbm %s6, %s818
          %s820 = sshll.u32 %s810, 4
          %s821 = int_to_ptr.vmem [resolvable:$true] %s820
          %826 = dma.vmem_to_hbm [thread:$0]  %s821, 512, %s819, %s807, 128, 128, 8
        $region48: #{tpu_custom_call.1} parent=43 // pred_fallthru
          _
      $region44: #{tpu_custom_call.1} parent=5 // pred_fallthru
        _
      %p827 = scmp.le.s32.totalorder 2, %s15
      // Predicated region
      $region49: #{tpu_custom_call.1} parent=5 // pred_check
        %p828 = pneg %p827
      $region50: #{tpu_custom_call.1} parent=5 // pred_check_branch
        %830 = sbr.rel (%p828) target = $region52
      $region51: #{tpu_custom_call.1} parent=5 // pred_region
        %s831 = ssub.s32 %s15, 2
        // Predicated region
        $region53: #{tpu_custom_call.1} parent=51 // pred_check
          %p832 = pneg %p175
        $region54: #{tpu_custom_call.1} parent=51 // pred_check_branch
          %834 = sbr.rel (%p832) target = $region56
        $region55: #{tpu_custom_call.1} parent=51 // pred_region
          %s835 = sand.u32 %s160, 1
          %s836 = scalar_lea.sflag [#allocation3], %s835
          %s837 = sand.u32 %s160, 1
          %s838 = smul.addr %s837, 32
          %s839 = scalar_lea.vmem [#allocation2], %s838
          %840 = dma.done %s836, 512
        $region56: #{tpu_custom_call.1} parent=51 // pred_fallthru
          _
      $region52: #{tpu_custom_call.1} parent=5 // pred_fallthru
        _
    $region6: #{tpu_custom_call.1} parent=1 // loop_footer
      %s19 = sadd.s32 1, %s15
    $region7: #{tpu_custom_call.1} parent=1 // loop_footer_branch
      %14 = sbr.rel target = $region3
    $region8: #{tpu_custom_call.1} parent=1 // loop_exit
      _
    %841 = vsyncpa [#allocation3], 1
    %s842 = scalar_lea.sflag [#allocation3], 1
    %843 = vsyncpa %s842, 1

</llo_original>
